<compile_context>
chip_gen: v7x
topology: tpu7x:2x2x1
jax: 0.10.0
libtpu: 0.0.40
codegen_flags: <defaults>
</compile_context>

<pallas_src>
import functools

import jax
import jax.numpy as jnp
import numpy as np
from jax.experimental import pallas as pl
from jax.experimental.pallas import tpu as pltpu


def _round_up(v, m):
    return (v + m - 1) // m * m


def _vmem_limit_bytes():
    """Per-generation VMEM budget: ~3/4 of physical (96 MiB v5e/v6e, 48 MiB v7x)."""
    cap = 64 * 1024 * 1024  # conservative default (v7x physical)
    try:
        cap = int(getattr(pltpu.get_tpu_info(), "vmem_capacity_bytes", cap))
    except Exception:
        pass
    return max(32 * 1024 * 1024, (cap // 4) * 3)


def dgmrf_fused_kernel(bias_ref, x_ref, m_ref, dg_ref, o_ref, *, pre_scale):
    """All layers for one (tt, N) row block of x.

    bias_ref : SMEM (L,)      f32  per-layer bias (application order)
    x_ref    : VMEM (tt, N)   f32  input row block (consumed at layer 0 only)
    m_ref    : VMEM (N, N)    bf16 oriented adjacency (A^T non-transpose / A transpose)
    dg_ref   : VMEM (1, 2, N) f32  row 0: alpha1*d^gamma, row 1: alpha2*d^(gamma-1)
    o_ref    : VMEM (tt, N)   f32  output row block = running activation (resident
                                   across the layer axis -> accumulator pattern)
    """
    l = pl.program_id(1)

    @pl.when(l == 0)
    def _():
        o_ref[...] = x_ref[...]

    x = o_ref[...]                       # (tt, N) f32 running activation
    dgp = dg_ref[0]                      # (2, N)
    dga = dgp[0:1, :]                    # alpha1 * d^gamma
    dg1a = dgp[1:2, :]                   # alpha2 * d^(gamma-1)
    bias = bias_ref[l]
    m = m_ref[...]

    # transpose path pre-scales the dense operand; non-transpose scales the result
    z = x * dg1a if pre_scale else x

    if m.dtype == jnp.bfloat16:
        # Native bf16 MXU matmul. Adjacency entries are exactly representable; the
        # dense operand uses a hi/lo bf16 split (two passes) to keep ~f32 accuracy.
        z_hi = z.astype(jnp.bfloat16)
        z_lo = (z - z_hi.astype(jnp.float32)).astype(jnp.bfloat16)
        agg = (jnp.dot(z_hi, m, preferred_element_type=jnp.float32)
               + jnp.dot(z_lo, m, preferred_element_type=jnp.float32))
    else:
        # Precision-safety fallback for weighted graphs not exact in bf16.
        agg = jnp.dot(z, m, preferred_element_type=jnp.float32)

    if not pre_scale:
        agg = agg * dg1a

    o_ref[...] = x * dga + agg + bias


def dgmrf_forward_fused(x, m, dg_pair, biases, *, pre_scale, tt, vmem_limit):
    """x: (T_pad, N_pad) f32, m: (N_pad, N_pad) bf16/f32, dg_pair: (L, 2, N_pad) f32,
    biases: (L,) f32 (already zeroed if with_bias=False), all in application order."""
    T_pad, N_pad = x.shape
    n_layers = biases.shape[0]
    num_i = T_pad // tt

    flops = int(2 * 2 * T_pad * N_pad * N_pad * n_layers)   # two bf16 MXU passes/layer
    bytes_accessed = int(m.size * m.dtype.itemsize + 2 * x.size * 4
                         + dg_pair.size * 4 + biases.size * 4)

    # Constant index map -> DMA'd exactly once; single-buffer to halve its VMEM cost.
    try:
        m_spec = pl.BlockSpec((N_pad, N_pad), lambda i, l: (0, 0),
                              pipeline_mode=pl.Buffered(1))
    except TypeError:  # older BlockSpec signature without pipeline_mode
        m_spec = pl.BlockSpec((N_pad, N_pad), lambda i, l: (0, 0))

    kernel = functools.partial(dgmrf_fused_kernel, pre_scale=pre_scale)
    return pl.pallas_call(
        kernel,
        out_shape=jax.ShapeDtypeStruct((T_pad, N_pad), jnp.float32),
        grid_spec=pltpu.PrefetchScalarGridSpec(
            num_scalar_prefetch=0,
            grid=(num_i, n_layers),
            in_specs=[
                pl.BlockSpec(memory_space=pltpu.MemorySpace.SMEM),     # (L,) biases
                pl.BlockSpec((tt, N_pad), lambda i, l: (i, 0)),        # x row block
                m_spec,                                                # adjacency
                pl.BlockSpec((1, 2, N_pad), lambda i, l: (l, 0, 0)),   # folded scalings
            ],
            out_specs=pl.BlockSpec((tt, N_pad), lambda i, l: (i, 0)),
        ),
        compiler_params=pltpu.CompilerParams(
            dimension_semantics=("parallel", "arbitrary"),
            vmem_limit_bytes=vmem_limit,
        ),
        cost_estimate=pl.CostEstimate(
            flops=flops, transcendentals=0, bytes_accessed=bytes_accessed),
    )(biases, x, m, dg_pair)


class DGMRFPallas:
    """JAX/Pallas port of the PyTorch DGMRF module (forward pass)."""

    def __init__(self, adj, degrees, n_layers, n_time):
        self.n_time = n_time
        self.n_layers = n_layers
        N = adj.shape[0]
        self.n_nodes = N
        # Pad nodes to a 256-multiple: matches the 2x256^2 MXUs on v6e/v7x and is
        # trivially also a 128-multiple for v5e.
        self.n_pad = _round_up(max(N, 256), 256)
        self.vmem_limit = _vmem_limit_bytes()

        adj = adj.astype(jnp.float32)
        degrees = degrees.astype(jnp.float32)
        self.adj_dense = adj          # unpadded, for the reference
        self.degrees = degrees

        # Zero-pad adjacency (padded nodes are isolated). bf16 storage is used only
        # when it is exact (binary / power-of-two weights); otherwise fall back to f32.
        adj_p = jnp.zeros((self.n_pad, self.n_pad), jnp.float32).at[:N, :N].set(adj)
        exact_bf16 = bool(jnp.all(adj_p.astype(jnp.bfloat16).astype(jnp.float32) == adj_p))
        m_dtype = jnp.bfloat16 if exact_bf16 else jnp.float32
        self.m_no_t = adj_p.T.astype(m_dtype)   # transpose=False:  x @ A^T
        self.m_t = adj_p.astype(m_dtype)        # transpose=True:  (x*dg1) @ A

        # Padded degrees -> 1.0 so d^gamma stays finite on padded lanes.
        deg_p = jnp.ones((self.n_pad,), jnp.float32).at[:N].set(degrees)
        log_deg = jnp.log(deg_p)

        # Deterministic per-layer parameters (synthetic init, no checkpoint load).
        a1s, a2s, gammas, biases = [], [], [], []
        for l in range(n_layers):
            a1s.append(0.8 - 0.05 * l)
            a2s.append(-0.3 + 0.05 * l)
            gammas.append(0.5 - 0.1 * l)
            biases.append(0.1 * (l + 1))
        self.layer_params = list(zip(a1s, a2s, gammas, biases))
        self.biases = jnp.array(biases, jnp.float32)

        # Fold alpha1 into d^gamma and alpha2 into d^(gamma-1) (valid on both paths
        # since a2*((x*dg1)@A) == (x*(a2*dg1))@A). Stored as one (L, 2, n_pad) stack.
        a1 = jnp.array(a1s, jnp.float32)[:, None]
        a2 = jnp.array(a2s, jnp.float32)[:, None]
        gam = jnp.array(gammas, jnp.float32)[:, None]
        dg = a1 * jnp.exp(gam * log_deg[None, :])             # (L, n_pad)
        dg1 = a2 * jnp.exp((gam - 1.0) * log_deg[None, :])    # (L, n_pad)
        self.dg_pair = jnp.stack([dg, dg1], axis=1)            # (L, 2, n_pad)

    def _fit_tt(self, tt):
        """Shrink the row tile (8-row steps) until the fused working set fits VMEM."""
        m_bytes = self.n_pad * self.n_pad * self.m_no_t.dtype.itemsize  # single-buffered
        small = 2 * (2 * self.n_pad * 4) + (2 << 20)                    # dg pair + slack
        while tt > 8:
            io_bytes = 2 * 2 * tt * self.n_pad * 4                      # x + out, dbl-buf
            if m_bytes + io_bytes + small <= self.vmem_limit:
                break
            tt -= 8
        return tt

    def forward(self, x, transpose=False, with_bias=True):
        T, N = x.shape
        assert N == self.n_nodes
        T8 = _round_up(max(T, 8), 8)
        # Keep >=2 row blocks whenever T allows so the "parallel" axis can shard
        # across both v7x TensorCores; cap at 256 rows, then fit the VMEM budget.
        if T8 >= 16:
            tt = min(256, max(8, _round_up(T8 // 2, 8)))
        else:
            tt = T8
        tt = self._fit_tt(tt)
        T_pad = _round_up(T8, tt)

        x_p = jnp.zeros((T_pad, self.n_pad), jnp.float32)
        x_p = x_p.at[:T, :N].set(x.astype(jnp.float32))

        if transpose:
            order = np.arange(self.n_layers - 1, -1, -1)
        else:
            order = np.arange(self.n_layers)
        idx = jnp.asarray(order, dtype=jnp.int32)
        dg_pair = self.dg_pair[idx]
        bias = (self.biases if with_bias else jnp.zeros_like(self.biases))[idx]
        m = self.m_t if transpose else self.m_no_t

        out = dgmrf_forward_fused(x_p, m, dg_pair, bias,
                                  pre_scale=transpose, tt=tt,
                                  vmem_limit=self.vmem_limit)
        return out[:T, :N]


def _reference_forward(model, x, transpose=False, with_bias=True):
    """Plain-JAX reference for validation (unpadded, layer-by-layer)."""
    A = model.adj_dense
    logd = jnp.log(model.degrees)
    params = list(reversed(model.layer_params)) if transpose else model.layer_params
    for (a1, a2, gamma, b) in params:
        dg = jnp.exp(gamma * logd)[None, :]
        dg1 = jnp.exp((gamma - 1.0) * logd)[None, :]
        bias = b if with_bias else 0.0
        if transpose:
            agg = (x * dg1) @ A
        else:
            agg = (x @ A.T) * dg1
        x = a1 * x * dg + a2 * agg + bias
    return x


if __name__ == "__main__":
    N_NODES = 200      # non-multiple of 128 -> exercises node padding to 256
    N_TIME = 24        # padded to T_pad=32 with tt=16 -> 2 row blocks (megacore-friendly)
    N_LAYERS = 3

    # Deterministic synthetic graph: sparse symmetric binary adjacency, no self-loops.
    idx = jnp.arange(N_NODES)
    adj = ((idx[:, None] * 13 + idx[None, :] * 7) % 17 == 0).astype(jnp.float32)
    adj = adj * (1.0 - jnp.eye(N_NODES, dtype=jnp.float32))
    adj = jnp.maximum(adj, adj.T)
    degrees = jnp.maximum(adj.sum(axis=1), 1.0)

    model = DGMRFPallas(adj, degrees, n_layers=N_LAYERS, n_time=N_TIME)

    key = jax.random.PRNGKey(0)
    x = jax.random.normal(key, (N_TIME, N_NODES), dtype=jnp.float32)

    out = jax.block_until_ready(model.forward(x, transpose=False, with_bias=True))
    out_t = jax.block_until_ready(model.forward(x, transpose=True, with_bias=False))

    ref = _reference_forward(model, x, transpose=False, with_bias=True)
    ref_t = _reference_forward(model, x, transpose=True, with_bias=False)
    np.testing.assert_allclose(np.asarray(out), np.asarray(ref), rtol=1e-3, atol=1e-3)
    np.testing.assert_allclose(np.asarray(out_t), np.asarray(ref_t), rtol=1e-3, atol=1e-3)

    print("KERNEL_OK")
</pallas_src>

<mosaic_0001>
module attributes {stable_mosaic.version = 11 : i64} {
  func.func @dgmrf_fused_kernel(%arg0: i32, %arg1: i32, %arg2: memref<3xf32, #tpu.memory_space<smem>>, %arg3: memref<16x256xf32, #tpu.memory_space<vmem>>, %arg4: memref<256x256xbf16, #tpu.memory_space<vmem>>, %arg5: memref<1x2x256xf32, #tpu.memory_space<vmem>>, %arg6: memref<16x256xf32, #tpu.memory_space<vmem>>) attributes {dimension_semantics = [#tpu.dimension_semantics<parallel>, #tpu.dimension_semantics<arbitrary>], iteration_bounds = array<i64: 2, 3>, scalar_prefetch = 0 : i64, scratch_operands = 0 : i64, tpu.core_type = #tpu.core_type<tc>, window_params = [{transform_indices = @transform_0, window_bounds = array<i64: 3>}, {transform_indices = @transform_1, window_bounds = array<i64: 16, 256>}, {pipeline_mode = #tpu.pipeline_mode<synchronous>, transform_indices = @transform_2, window_bounds = array<i64: 256, 256>}, {transform_indices = @transform_3, window_bounds = array<i64: 1, 2, 256>}, {transform_indices = @transform_4, window_bounds = array<i64: 16, 256>}]} {
    %c0_i32 = arith.constant 0 : i32
    %0 = arith.cmpi eq, %arg1, %c0_i32 : i32
    %1 = arith.extui %0 : i1 to i32
    %c0_i32_0 = arith.constant 0 : i32
    %2 = arith.cmpi ne, %1, %c0_i32_0 : i32
    scf.if %2 {
      %c0_10 = arith.constant 0 : index
      %c0_11 = arith.constant 0 : index
      %26 = vector.load %arg3[%c0_10, %c0_11] : memref<16x256xf32, #tpu.memory_space<vmem>>, vector<16x256xf32>
      %c0_12 = arith.constant 0 : index
      %c0_13 = arith.constant 0 : index
      %27 = vector.load %arg6[%c0_12, %c0_13] : memref<16x256xf32, #tpu.memory_space<vmem>>, vector<16x256xf32>
      tpu.vector_store %arg6[%c0_12, %c0_13], %26 {strides = array<i32>} : memref<16x256xf32, #tpu.memory_space<vmem>>, vector<16x256xf32>,
    } else {
    }
    %c0 = arith.constant 0 : index
    %c0_1 = arith.constant 0 : index
    %3 = vector.load %arg6[%c0, %c0_1] : memref<16x256xf32, #tpu.memory_space<vmem>>, vector<16x256xf32>
    %c0_2 = arith.constant 0 : index
    %c0_3 = arith.constant 0 : index
    %c0_4 = arith.constant 0 : index
    %4 = vector.load %arg5[%c0_2, %c0_3, %c0_4] : memref<1x2x256xf32, #tpu.memory_space<vmem>>, vector<1x2x256xf32>
    %5 = vector.shape_cast %4 : vector<1x2x256xf32> to vector<2x256xf32>
    %6 = vector.extract_strided_slice %5 {offsets = [0, 0], sizes = [1, 256], strides = [1, 1]} : vector<2x256xf32> to vector<1x256xf32>
    %7 = vector.extract_strided_slice %5 {offsets = [1, 0], sizes = [1, 256], strides = [1, 1]} : vector<2x256xf32> to vector<1x256xf32>
    %8 = arith.index_cast %arg1 : i32 to index
    %9 = memref.load %arg2[%8] : memref<3xf32, #tpu.memory_space<smem>>
    %c0_5 = arith.constant 0 : index
    %c0_6 = arith.constant 0 : index
    %10 = vector.load %arg4[%c0_5, %c0_6] : memref<256x256xbf16, #tpu.memory_space<vmem>>, vector<256x256xbf16>
    %11 = arith.truncf %3 : vector<16x256xf32> to vector<16x256xbf16>
    %12 = arith.extf %11 : vector<16x256xbf16> to vector<16x256xf32>
    %13 = arith.subf %3, %12 : vector<16x256xf32>
    %14 = arith.truncf %13 : vector<16x256xf32> to vector<16x256xbf16>
    %cst = arith.constant dense<0.000000e+00> : vector<16x256xf32>
    %15 = tpu.matmul %11, %10, %cst {dimension_numbers = #tpu.dot_dimension_numbers<[1], [0], [0], [1], [0, 0, 1, 1], [], []>} : vector<16x256xbf16>, vector<256x256xbf16>, vector<16x256xf32> -> vector<16x256xf32>
    %cst_7 = arith.constant dense<0.000000e+00> : vector<16x256xf32>
    %16 = tpu.matmul %14, %10, %cst_7 {dimension_numbers = #tpu.dot_dimension_numbers<[1], [0], [0], [1], [0, 0, 1, 1], [], []>} : vector<16x256xbf16>, vector<256x256xbf16>, vector<16x256xf32> -> vector<16x256xf32>
    %17 = arith.addf %15, %16 : vector<16x256xf32>
    %18 = vector.broadcast %7 : vector<1x256xf32> to vector<16x256xf32>
    %19 = arith.mulf %17, %18 : vector<16x256xf32>
    %20 = vector.broadcast %6 : vector<1x256xf32> to vector<16x256xf32>
    %21 = arith.mulf %3, %20 : vector<16x256xf32>
    %22 = arith.addf %21, %19 : vector<16x256xf32>
    %23 = vector.broadcast %9 : f32 to vector<16x256xf32>
    %24 = arith.addf %22, %23 : vector<16x256xf32>
    %c0_8 = arith.constant 0 : index
    %c0_9 = arith.constant 0 : index
    %25 = vector.load %arg6[%c0_8, %c0_9] : memref<16x256xf32, #tpu.memory_space<vmem>>, vector<16x256xf32>
    tpu.vector_store %arg6[%c0_8, %c0_9], %24 {strides = array<i32>} : memref<16x256xf32, #tpu.memory_space<vmem>>, vector<16x256xf32>,
    return
  }
  func.func @transform_0(%arg0: i32, %arg1: i32) -> i32 {
    %c0_i32 = arith.constant 0 : i32
    %c0_i32_0 = arith.constant 0 : i32
    return %c0_i32 : i32
  }
  func.func @transform_1(%arg0: i32, %arg1: i32) -> (i32, i32) {
    %c0_i32 = arith.constant 0 : i32
    %c0_i32_0 = arith.constant 0 : i32
    return %arg0, %c0_i32 : i32, i32
  }
  func.func @transform_2(%arg0: i32, %arg1: i32) -> (i32, i32) {
    %c0_i32 = arith.constant 0 : i32
    %c0_i32_0 = arith.constant 0 : i32
    %c0_i32_1 = arith.constant 0 : i32
    return %c0_i32, %c0_i32_0 : i32, i32
  }
  func.func @transform_3(%arg0: i32, %arg1: i32) -> (i32, i32, i32) {
    %c0_i32 = arith.constant 0 : i32
    %c0_i32_0 = arith.constant 0 : i32
    %c0_i32_1 = arith.constant 0 : i32
    return %arg1, %c0_i32, %c0_i32_0 : i32, i32, i32
  }
  func.func @transform_4(%arg0: i32, %arg1: i32) -> (i32, i32) {
    %c0_i32 = arith.constant 0 : i32
    %c0_i32_0 = arith.constant 0 : i32
    return %arg0, %c0_i32 : i32, i32
  }
}

</mosaic_0001>

<llo_original>
// kernel: tpu_custom_call.1
$region0: #{tpu_custom_call.1}
  #allocation0 [shape = 'u32[]', space=smem, size = 0x4, offset = 0x4, fixed_abs, tag = 'smem constant byte address 0x4 - core index']
  #allocation1 [shape = 'u32[144,128]{1,0:T(1,128)}', space=vmem, size = 0x12000, scoped, tag = 'internal scratch']
  %s0 = inlined_call_operand.hbm [shape: f32[3], index: 0, kind: input, shape index: {}]
  %s1 = inlined_call_operand.hbm [shape: f32[32,256], index: 1, kind: input, shape index: {}]
  %s2 = inlined_call_operand.hbm [shape: bf16[256,256], index: 2, kind: input, shape index: {}]
  %s3 = inlined_call_operand.hbm [shape: f32[3,2,256], index: 3, kind: input, shape index: {}]
  %s4 = inlined_call_operand.hbm [shape: f32[32,256], index: 4, kind: output, shape index: {}]
  %s5 = sld [smem:[#allocation0]]
  $region69: #{tpu_custom_call.1} parent=0
    _
  %s7 = ssub.s32 1, %s5
  %s8 = scalar_select 0, %s7, %s5
  $region1: #{tpu_custom_call.1} parent=0
    #allocation2 [shape = 'u8[512]{0}', space=smem, size = 0x200, scoped, tag = 'input window, operand 0, single buffered']
    #allocation3 [shape = 's32[2]{0}', space=sflag, size = 0x8, scoped, tag = 'scoped memory for tpu_custom_call.1']
    #allocation4 [shape = 's32[2]{0}', space=sflag, size = 0x8, scoped, tag = 'scoped memory for tpu_custom_call.1']
    #allocation5 [shape = 's32[2]{0}', space=sflag, size = 0x8, scoped, tag = 'scoped memory for tpu_custom_call.1']
    #allocation6 [shape = 'u8[32768]{0}', space=vmem, size = 0x8000, scoped, tag = 'input window, operand 1']
    #allocation7 [shape = 'u8[131072]{0}', space=vmem, size = 0x20000, scoped, tag = 'input window, operand 2, single buffered']
    #allocation8 [shape = 's32[1]{0}', space=sflag, size = 0x4, scoped, tag = 'scoped memory for tpu_custom_call.1']
    #allocation9 [shape = 'u8[4096]{0}', space=vmem, size = 0x1000, scoped, tag = 'input window, operand 3']
    #allocation10 [shape = 'u8[32768]{0}', space=vmem, size = 0x8000, scoped, tag = 'output window, operand 0']
    %9 = vsyncpa [#allocation5], 0
    %10 = vsyncpa [#allocation3], 0
    %s11 = scalar_lea.sflag [#allocation3], 1
    %12 = vsyncpa %s11, 0
    %13 = vsyncpa [#allocation8], 0
    %14 = vsyncpa [#allocation4], 0
    %s15 = scalar_lea.sflag [#allocation4], 1
    %16 = vsyncpa %s15, 0
    loop: start=0, step=1, limit=8
    $region2: #{tpu_custom_call.1} parent=1 // loop_pre_header
      _
    $region3: #{tpu_custom_call.1} parent=1 // loop_header
      %s18 = sphi 0, %s22
      %p19 = scmp.ge.s32.totalorder %s18, 8
      %s25 = sphi 0, %s37
      %s26 = sphi 0, %s33
      %s27 = sphi 0, %s25
      %s28 = sphi 0, %s26
      %s29 = sphi 0, %s27
      %s30 = sphi 0, %s28
      %s38 = sphi 0, %s38
      %s40 = sphi 0, %s38
      %s41 = sphi 0, %s40
      %s55 = sphi 0, %s41
      %s61 = sphi 0, %s63
      %s64 = sphi 0, %s61
      %s65 = sphi 0, %s64
      %s81 = sphi 0, %s65
      %s85 = sphi 0, %s85
      %s87 = sphi 0, %s85
      %s88 = sphi 0, %s87
      %s102 = sphi 0, %s88
      %s108 = sphi 0, %s110
      %s111 = sphi 0, %s108
      %s112 = sphi 0, %s111
      %s128 = sphi 0, %s112
      %s134 = sphi 0, %s136
      %s137 = sphi 0, %s134
      %s138 = sphi 0, %s137
      %s154 = sphi 0, %s138
    $region4: #{tpu_custom_call.1} parent=1 // loop_header_branch
      %21 = sbr.rel (%p19) target = $region8
    $region5: #{tpu_custom_call.1} parent=1 // loop_body
      %s23 = ssub.s32 %s18, 1
      %s24 = ssub.s32 %s18, 2
      %s31 = sadd.s32 1, %s26
      %p32 = scmp.ge.s32.totalorder %s31, 3
      %s33 = scalar_select %p32, 0, %s31
      %s34 = sadd.s32 1, %s25
      %s35 = scalar_select %p32, %s34, %s25
      %p36 = scmp.ge.s32.totalorder %s35, 2
      %s37 = scalar_select %p36, 0, %s35
      %s39 = sadd.s32 %s38, 1
      %p42 = scmp.eq.s32.totalorder %s18, 5
      %p43 = scmp.ne.s32.totalorder %s38, %s40
      %p44 = scmp.eq.s32.totalorder %s18, 0
      %p45 = por %p43, %p44
      %p46 = scmp.ne.s32.totalorder %s38, %s40
      %p47 = scmp.eq.s32.totalorder %s23, 5
      %p48 = por %p46, %p47
      %p49 = scmp.ne.s32.totalorder %s40, %s41
      %p50 = scmp.eq.s32.totalorder %s23, 0
      %p51 = por %p49, %p50
      %p52 = scmp.ne.s32.totalorder %s40, %s41
      %p53 = scmp.eq.s32.totalorder %s24, 5
      %p54 = por %p52, %p53
      %p56 = scmp.ne.s32.totalorder %s41, %s55
      %p57 = scmp.eq.s32.totalorder %s24, 0
      %p58 = por %p56, %p57
      %s59 = ssub.s32 %s25, %s37
      %p60 = scmp.eq.s32.totalorder %s59, 0
      %s62 = sadd.s32 %s61, 1
      %s63 = scalar_select %p60, %s61, %s62
      %p66 = pneg %p60
      %p67 = scmp.eq.s32.totalorder %s18, 5
      %p68 = por %p66, %p67
      %p69 = scmp.ne.s32.totalorder %s61, %s64
      %p70 = scmp.eq.s32.totalorder %s18, 0
      %p71 = por %p69, %p70
      %p72 = scmp.ne.s32.totalorder %s61, %s64
      %p73 = scmp.eq.s32.totalorder %s23, 5
      %p74 = por %p72, %p73
      %p75 = scmp.ne.s32.totalorder %s64, %s65
      %p76 = scmp.eq.s32.totalorder %s23, 0
      %p77 = por %p75, %p76
      %p78 = scmp.ne.s32.totalorder %s64, %s65
      %p79 = scmp.eq.s32.totalorder %s24, 5
      %p80 = por %p78, %p79
      %p82 = scmp.ne.s32.totalorder %s65, %s81
      %p83 = scmp.eq.s32.totalorder %s24, 0
      %p84 = por %p82, %p83
      %s86 = sadd.s32 %s85, 1
      %p89 = scmp.eq.s32.totalorder %s18, 5
      %p90 = scmp.ne.s32.totalorder %s85, %s87
      %p91 = scmp.eq.s32.totalorder %s18, 0
      %p92 = por %p90, %p91
      %p93 = scmp.ne.s32.totalorder %s85, %s87
      %p94 = scmp.eq.s32.totalorder %s23, 5
      %p95 = por %p93, %p94
      %p96 = scmp.ne.s32.totalorder %s87, %s88
      %p97 = scmp.eq.s32.totalorder %s23, 0
      %p98 = por %p96, %p97
      %p99 = scmp.ne.s32.totalorder %s87, %s88
      %p100 = scmp.eq.s32.totalorder %s24, 5
      %p101 = por %p99, %p100
      %p103 = scmp.ne.s32.totalorder %s88, %s102
      %p104 = scmp.eq.s32.totalorder %s24, 0
      %p105 = por %p103, %p104
      %s106 = ssub.s32 %s26, %s33
      %p107 = scmp.eq.s32.totalorder %s106, 0
      %s109 = sadd.s32 %s108, 1
      %s110 = scalar_select %p107, %s108, %s109
      %p113 = pneg %p107
      %p114 = scmp.eq.s32.totalorder %s18, 5
      %p115 = por %p113, %p114
      %p116 = scmp.ne.s32.totalorder %s108, %s111
      %p117 = scmp.eq.s32.totalorder %s18, 0
      %p118 = por %p116, %p117
      %p119 = scmp.ne.s32.totalorder %s108, %s111
      %p120 = scmp.eq.s32.totalorder %s23, 5
      %p121 = por %p119, %p120
      %p122 = scmp.ne.s32.totalorder %s111, %s112
      %p123 = scmp.eq.s32.totalorder %s23, 0
      %p124 = por %p122, %p123
      %p125 = scmp.ne.s32.totalorder %s111, %s112
      %p126 = scmp.eq.s32.totalorder %s24, 5
      %p127 = por %p125, %p126
      %p129 = scmp.ne.s32.totalorder %s112, %s128
      %p130 = scmp.eq.s32.totalorder %s24, 0
      %p131 = por %p129, %p130
      %s132 = ssub.s32 %s25, %s37
      %p133 = scmp.eq.s32.totalorder %s132, 0
      %s135 = sadd.s32 %s134, 1
      %s136 = scalar_select %p133, %s134, %s135
      %p139 = pneg %p133
      %p140 = scmp.eq.s32.totalorder %s18, 5
      %p141 = por %p139, %p140
      %p142 = scmp.ne.s32.totalorder %s134, %s137
      %p143 = scmp.eq.s32.totalorder %s18, 0
      %p144 = por %p142, %p143
      %p145 = scmp.ne.s32.totalorder %s134, %s137
      %p146 = scmp.eq.s32.totalorder %s23, 5
      %p147 = por %p145, %p146
      %p148 = scmp.ne.s32.totalorder %s137, %s138
      %p149 = scmp.eq.s32.totalorder %s23, 0
      %p150 = por %p148, %p149
      %p151 = scmp.ne.s32.totalorder %s137, %s138
      %p152 = scmp.eq.s32.totalorder %s24, 5
      %p153 = por %p151, %p152
      %p155 = scmp.ne.s32.totalorder %s138, %s154
      %p156 = scmp.eq.s32.totalorder %s24, 0
      %p157 = por %p155, %p156
      %p158 = scmp.le.s32.totalorder 1, %s18
      %p159 = scmp.lt.s32.totalorder %s18, 7
      %p160 = pnand %p158, %p159
      %p161 = pneg %p160
      // Predicated region
      $region9: #{tpu_custom_call.1} parent=5 // pred_check
        _
      $region10: #{tpu_custom_call.1} parent=5 // pred_check_branch
        %163 = sbr.rel (%p160) target = $region12
      $region11: #{tpu_custom_call.1} parent=5 // pred_region
        %s164 = ssub.s32 %s18, 1
        // Predicated region
        $region13: #{tpu_custom_call.1} parent=11 // pred_check
          %p165 = pneg %p51
        $region14: #{tpu_custom_call.1} parent=11 // pred_check_branch
          %167 = sbr.rel (%p165) target = $region16
        $region15: #{tpu_custom_call.1} parent=11 // pred_region
          %s169 = ssub.s32 16, 16
          %170 = vsyncadd [#allocation5], %s169
          %173 = dma.hbm_to_smem %s0, 16, [#allocation2], [#allocation5]
        $region16: #{tpu_custom_call.1} parent=11 // pred_fallthru
          _
        // Predicated region
        $region17: #{tpu_custom_call.1} parent=11 // pred_check
          %p174 = pneg %p98
        $region18: #{tpu_custom_call.1} parent=11 // pred_check_branch
          %176 = sbr.rel (%p174) target = $region20
        $region19: #{tpu_custom_call.1} parent=11 // pred_region
          %s178 = ssub.s32 4096, 4096
          %179 = vsyncadd [#allocation8], %s178
          %s180 = sshll.u32 [#allocation7], 4
          %s181 = int_to_ptr.vmem [resolvable:$true] %s180
          %186 = dma.hbm_to_vmem [thread:$0]  %s2, 4096, %s181, [#allocation8], 128, 128, 8
        $region20: #{tpu_custom_call.1} parent=11 // pred_fallthru
          _
      $region12: #{tpu_custom_call.1} parent=5 // pred_fallthru
        _
      %p187 = scmp.lt.s32.totalorder %s18, 6
      // Predicated region
      $region21: #{tpu_custom_call.1} parent=5 // pred_check
        %p188 = pneg %p187
      $region22: #{tpu_custom_call.1} parent=5 // pred_check_branch
        %190 = sbr.rel (%p188) target = $region24
      $region23: #{tpu_custom_call.1} parent=5 // pred_region
        // Predicated region
        $region25: #{tpu_custom_call.1} parent=23 // pred_check
          %p191 = pneg %p71
        $region26: #{tpu_custom_call.1} parent=23 // pred_check_branch
          %193 = sbr.rel (%p191) target = $region28
        $region27: #{tpu_custom_call.1} parent=23 // pred_region
          %s194 = sand.u32 %s18, 1
          %s195 = scalar_lea.sflag [#allocation3], %s194
          %s196 = sand.u32 %s61, 1
          %s197 = smul.addr %s196, 32
          %s198 = scalar_lea.vmem [#allocation6], %s197
          %s199 = smul.u32 2, %s25
          %s201 = ssub.s32 512, 512
          %202 = vsyncadd %s195, %s201
          %s203 = smul.addr %s199, 2
          %s204 = smul.addr %s203, 128
          %s205 = scalar_lea.hbm %s1, %s204
          %s206 = sshll.u32 %s198, 4
          %s207 = int_to_ptr.vmem [resolvable:$true] %s206
          %212 = dma.hbm_to_vmem [thread:$0]  %s205, 512, %s207, %s195, 256, 256, 16
        $region28: #{tpu_custom_call.1} parent=23 // pred_fallthru
          _
        // Predicated region
        $region29: #{tpu_custom_call.1} parent=23 // pred_check
          %p213 = pneg %p118
        $region30: #{tpu_custom_call.1} parent=23 // pred_check_branch
          %215 = sbr.rel (%p213) target = $region32
        $region31: #{tpu_custom_call.1} parent=23 // pred_region
          %s216 = sand.u32 %s18, 1
          %s217 = scalar_lea.sflag [#allocation3], %s216
          %s218 = sand.u32 %s108, 1
          %s219 = smul.addr %s218, 4
          %s220 = scalar_lea.vmem [#allocation9], %s219
          %s222 = ssub.s32 64, 64
          %223 = vsyncadd %s217, %s222
          %s224 = smul.addr %s26, 2
          %s225 = smul.addr %s224, 32
          %s226 = scalar_lea.hbm %s3, %s225
          %s228 = sshll.u32 %s220, 4
          %s229 = int_to_ptr.vmem [resolvable:$true] %s228
          %231 = dma.hbm_to_vmem [thread:$0]  %s226, 64, %s229, %s217
        $region32: #{tpu_custom_call.1} parent=23 // pred_fallthru
          _
      $region24: #{tpu_custom_call.1} parent=5 // pred_fallthru
        _
      %p232 = scmp.le.s32.totalorder 1, %s18
      %p233 = scmp.lt.s32.totalorder %s18, 7
      %p234 = pnand %p232, %p233
      %p235 = pneg %p234
      // Predicated region
      $region33: #{tpu_custom_call.1} parent=5 // pred_check
        _
      $region34: #{tpu_custom_call.1} parent=5 // pred_check_branch
        %237 = sbr.rel (%p234) target = $region36
      $region35: #{tpu_custom_call.1} parent=5 // pred_region
        %s238 = ssub.s32 %s18, 1
        // Predicated region
        $region37: #{tpu_custom_call.1} parent=35 // pred_check
          %p239 = pneg %p51
        $region38: #{tpu_custom_call.1} parent=35 // pred_check_branch
          %241 = sbr.rel (%p239) target = $region40
        $region39: #{tpu_custom_call.1} parent=35 // pred_region
          %242 = dma.done [#allocation5], 16
        $region40: #{tpu_custom_call.1} parent=35 // pred_fallthru
          _
        %s243 = sand.u32 %s23, 1
        %s244 = scalar_lea.sflag [#allocation3], %s243
        %s245 = sand.u32 %s64, 1
        %s246 = smul.addr %s245, 32
        %s247 = scalar_lea.vmem [#allocation6], %s246
        // Predicated region
        $region41: #{tpu_custom_call.1} parent=35 // pred_check
          %p248 = pneg %p77
        $region42: #{tpu_custom_call.1} parent=35 // pred_check_branch
          %250 = sbr.rel (%p248) target = $region44
        $region43: #{tpu_custom_call.1} parent=35 // pred_region
          %251 = dma.done %s244, 512
        $region44: #{tpu_custom_call.1} parent=35 // pred_fallthru
          _
        // Predicated region
        $region45: #{tpu_custom_call.1} parent=35 // pred_check
          %p252 = pneg %p98
        $region46: #{tpu_custom_call.1} parent=35 // pred_check_branch
          %254 = sbr.rel (%p252) target = $region48
        $region47: #{tpu_custom_call.1} parent=35 // pred_region
          %255 = dma.done [#allocation8], 4096
        $region48: #{tpu_custom_call.1} parent=35 // pred_fallthru
          _
        %s256 = sand.u32 %s23, 1
        %s257 = scalar_lea.sflag [#allocation3], %s256
        %s258 = sand.u32 %s111, 1
        %s259 = smul.addr %s258, 4
        %s260 = scalar_lea.vmem [#allocation9], %s259
        // Predicated region
        $region49: #{tpu_custom_call.1} parent=35 // pred_check
          %p261 = pneg %p124
        $region50: #{tpu_custom_call.1} parent=35 // pred_check_branch
          %263 = sbr.rel (%p261) target = $region52
        $region51: #{tpu_custom_call.1} parent=35 // pred_region
          %264 = dma.done %s257, 64
        $region52: #{tpu_custom_call.1} parent=35 // pred_fallthru
          _
        %265 = sfence
        %p266 = pneg %p51
        %p267 = pneg %p48
        %s268 = sand.u32 %s23, 1
        %s269 = scalar_lea.sflag [#allocation3], %s268
        %s270 = sand.u32 %s64, 1
        %s271 = smul.addr %s270, 32
        %s272 = scalar_lea.vmem [#allocation6], %s271
        %p273 = pneg %p77
        %p274 = pneg %p74
        %p275 = pneg %p98
        %p276 = pneg %p95
        %s277 = sand.u32 %s23, 1
        %s278 = scalar_lea.sflag [#allocation3], %s277
        %s279 = sand.u32 %s111, 1
        %s280 = smul.addr %s279, 4
        %s281 = scalar_lea.vmem [#allocation9], %s280
        %p282 = pneg %p124
        %p283 = pneg %p121
        %p284 = pneg %p150
        %p285 = pneg %p147
        %s286 = sand.u32 %s137, 1
        %s287 = scalar_lea.sflag [#allocation4], %s286
        %s288 = sand.u32 %s137, 1
        %s289 = smul.addr %s288, 32
        %s290 = scalar_lea.vmem [#allocation10], %s289
        %s291 = smul.u32 2, %s27
        %s292 = smul.u32 2, %s27
        %p293 = scmp.eq.s32.totalorder %s28, 0
        // Predicated region
        $region53: #{tpu_custom_call.1} parent=35 // pred_check
          %p294 = pneg %p293
        $region54: #{tpu_custom_call.1} parent=35 // pred_check_branch
          %296 = sbr.rel (%p294) target = $region56
        $region55: #{tpu_custom_call.1} parent=35 // pred_region
          %v297 = vld [vmem:[%s247] sm:$0xff]
          %v298 = vld [vmem:[%s247 + $0x8] sm:$0xff]
          %v299 = vld [vmem:[%s247 + $0x10] sm:$0xff]
          %v300 = vld [vmem:[%s247 + $0x18] sm:$0xff]
          %301 = vst [vmem:[%s290] sm:$0xff] %v297
          %302 = vst [vmem:[%s290 + $0x8] sm:$0xff] %v298
          %303 = vst [vmem:[%s290 + $0x10] sm:$0xff] %v299
          %304 = vst [vmem:[%s290 + $0x18] sm:$0xff] %v300
        $region56: #{tpu_custom_call.1} parent=35 // pred_fallthru
          _
        %v305 = vld [vmem:[%s290] sm:$0xff]
        %v306 = vld [vmem:[%s290 + $0x8] sm:$0xff]
        %v307 = vld [vmem:[%s290 + $0x10] sm:$0xff]
        %v308 = vld [vmem:[%s290 + $0x18] sm:$0xff]
        %v309 = vld [vmem:[%s260] sm:$0xf]
        %s310 = sld [smem:[#allocation2 + %s28]]
        %v311 = vld [vmem:[#allocation7] sm:$0xff]
        %v312 = vld [vmem:[#allocation7 + $0x8] sm:$0xff]
        %v313 = vld [vmem:[#allocation7 + $0x10] sm:$0xff]
        %v314 = vld [vmem:[#allocation7 + $0x18] sm:$0xff]
        %v315 = vld [vmem:[#allocation7 + $0x20] sm:$0xff]
        %v316 = vld [vmem:[#allocation7 + $0x28] sm:$0xff]
        %v317 = vld [vmem:[#allocation7 + $0x30] sm:$0xff]
        %v318 = vld [vmem:[#allocation7 + $0x38] sm:$0xff]
        %v319 = vld [vmem:[#allocation7 + $0x40] sm:$0xff]
        %v320 = vld [vmem:[#allocation7 + $0x48] sm:$0xff]
        %v321 = vld [vmem:[#allocation7 + $0x50] sm:$0xff]
        %v322 = vld [vmem:[#allocation7 + $0x58] sm:$0xff]
        %v323 = vld [vmem:[#allocation7 + $0x60] sm:$0xff]
        %v324 = vld [vmem:[#allocation7 + $0x68] sm:$0xff]
        %v325 = vld [vmem:[#allocation7 + $0x70] sm:$0xff]
        %v326 = vld [vmem:[#allocation7 + $0x78] sm:$0xff]
        %v327 = vld [vmem:[#allocation7 + $0x80] sm:$0xff]
        %v328 = vld [vmem:[#allocation7 + $0x88] sm:$0xff]
        %v329 = vld [vmem:[#allocation7 + $0x90] sm:$0xff]
        %v330 = vld [vmem:[#allocation7 + $0x98] sm:$0xff]
        %v331 = vld [vmem:[#allocation7 + $0xa0] sm:$0xff]
        %v332 = vld [vmem:[#allocation7 + $0xa8] sm:$0xff]
        %v333 = vld [vmem:[#allocation7 + $0xb0] sm:$0xff]
        %v334 = vld [vmem:[#allocation7 + $0xb8] sm:$0xff]
        %v335 = vld [vmem:[#allocation7 + $0xc0] sm:$0xff]
        %v336 = vld [vmem:[#allocation7 + $0xc8] sm:$0xff]
        %v337 = vld [vmem:[#allocation7 + $0xd0] sm:$0xff]
        %v338 = vld [vmem:[#allocation7 + $0xd8] sm:$0xff]
        %v339 = vld [vmem:[#allocation7 + $0xe0] sm:$0xff]
        %v340 = vld [vmem:[#allocation7 + $0xe8] sm:$0xff]
        %v341 = vld [vmem:[#allocation7 + $0xf0] sm:$0xff]
        %v342 = vld [vmem:[#allocation7 + $0xf8] sm:$0xff]
        %v343 = vpack.c.bf16 %v307, %v305
        %v344 = vpack.c.bf16 %v308, %v306
        %v345 = vunpack.c.l.bf16 %v343
        %v346 = vunpack.c.l.bf16 %v344
        %v347 = vunpack.c.h.bf16 %v343
        %v348 = vunpack.c.h.bf16 %v344
        %v349 = vsub.f32 %v305, %v345
        %v350 = vsub.f32 %v306, %v346
        %v351 = vsub.f32 %v307, %v347
        %v352 = vsub.f32 %v308, %v348
        %v353 = vpack.c.bf16 %v351, %v349
        %v354 = vpack.c.bf16 %v352, %v350
        %v387 = vunpack.c.l.b16 %v311
        %v388 = vunpack.c.h.b16 %v311
        %v389 = vunpack.c.l.b16 %v312
        %v390 = vunpack.c.h.b16 %v312
        %v391 = vunpack.c.l.b16 %v313
        %v392 = vunpack.c.h.b16 %v313
        %v393 = vunpack.c.l.b16 %v314
        %v394 = vunpack.c.h.b16 %v314
        %v395 = vunpack.c.l.b16 %v315
        %v396 = vunpack.c.h.b16 %v315
        %v397 = vunpack.c.l.b16 %v316
        %v398 = vunpack.c.h.b16 %v316
        %v399 = vunpack.c.l.b16 %v317
        %v400 = vunpack.c.h.b16 %v317
        %v401 = vunpack.c.l.b16 %v318
        %v402 = vunpack.c.h.b16 %v318
        %v403 = vunpack.c.l.b16 %v319
        %v404 = vunpack.c.h.b16 %v319
        %v405 = vunpack.c.l.b16 %v320
        %v406 = vunpack.c.h.b16 %v320
        %v407 = vunpack.c.l.b16 %v321
        %v408 = vunpack.c.h.b16 %v321
        %v409 = vunpack.c.l.b16 %v322
        %v410 = vunpack.c.h.b16 %v322
        %v411 = vunpack.c.l.b16 %v323
        %v412 = vunpack.c.h.b16 %v323
        %v413 = vunpack.c.l.b16 %v324
        %v414 = vunpack.c.h.b16 %v324
        %v415 = vunpack.c.l.b16 %v325
        %v416 = vunpack.c.h.b16 %v325
        %v417 = vunpack.c.l.b16 %v326
        %v418 = vunpack.c.h.b16 %v326
        %v419 = vunpack.c.l.b16 %v327
        %v420 = vunpack.c.h.b16 %v327
        %v421 = vunpack.c.l.b16 %v328
        %v422 = vunpack.c.h.b16 %v328
        %v423 = vunpack.c.l.b16 %v329
        %v424 = vunpack.c.h.b16 %v329
        %v425 = vunpack.c.l.b16 %v330
        %v426 = vunpack.c.h.b16 %v330
        %v427 = vunpack.c.l.b16 %v331
        %v428 = vunpack.c.h.b16 %v331
        %v429 = vunpack.c.l.b16 %v332
        %v430 = vunpack.c.h.b16 %v332
        %v431 = vunpack.c.l.b16 %v333
        %v432 = vunpack.c.h.b16 %v333
        %v433 = vunpack.c.l.b16 %v334
        %v434 = vunpack.c.h.b16 %v334
        %v435 = vunpack.c.l.b16 %v335
        %v436 = vunpack.c.h.b16 %v335
        %v437 = vunpack.c.l.b16 %v336
        %v438 = vunpack.c.h.b16 %v336
        %v439 = vunpack.c.l.b16 %v337
        %v440 = vunpack.c.h.b16 %v337
        %v441 = vunpack.c.l.b16 %v338
        %v442 = vunpack.c.h.b16 %v338
        %v443 = vunpack.c.l.b16 %v339
        %v444 = vunpack.c.h.b16 %v339
        %v445 = vunpack.c.l.b16 %v340
        %v446 = vunpack.c.h.b16 %v340
        %v447 = vunpack.c.l.b16 %v341
        %v448 = vunpack.c.h.b16 %v341
        %v449 = vunpack.c.l.b16 %v342
        %v450 = vunpack.c.h.b16 %v342
        %v451 = vpack.c.b16 %v389, %v387
        %v452 = vpack.c.b16 %v390, %v388
        %v453 = vpack.c.b16 %v393, %v391
        %v454 = vpack.c.b16 %v394, %v392
        %v455 = vpack.c.b16 %v397, %v395
        %v456 = vpack.c.b16 %v398, %v396
        %v457 = vpack.c.b16 %v401, %v399
        %v458 = vpack.c.b16 %v402, %v400
        %v459 = vpack.c.b16 %v405, %v403
        %v460 = vpack.c.b16 %v406, %v404
        %v461 = vpack.c.b16 %v409, %v407
        %v462 = vpack.c.b16 %v410, %v408
        %v463 = vpack.c.b16 %v413, %v411
        %v464 = vpack.c.b16 %v414, %v412
        %v465 = vpack.c.b16 %v417, %v415
        %v466 = vpack.c.b16 %v418, %v416
        %v467 = vpack.c.b16 %v421, %v419
        %v468 = vpack.c.b16 %v422, %v420
        %v469 = vpack.c.b16 %v425, %v423
        %v470 = vpack.c.b16 %v426, %v424
        %v471 = vpack.c.b16 %v429, %v427
        %v472 = vpack.c.b16 %v430, %v428
        %v473 = vpack.c.b16 %v433, %v431
        %v474 = vpack.c.b16 %v434, %v432
        %v475 = vpack.c.b16 %v437, %v435
        %v476 = vpack.c.b16 %v438, %v436
        %v477 = vpack.c.b16 %v441, %v439
        %v478 = vpack.c.b16 %v442, %v440
        %v479 = vpack.c.b16 %v445, %v443
        %v480 = vpack.c.b16 %v446, %v444
        %v481 = vpack.c.b16 %v449, %v447
        %v482 = vpack.c.b16 %v450, %v448
        %515 = vmatprep.subr.bf16.mxu0 %v452
        %516 = vmatpush1.bf16.msra.mxu0 %v451
        %517 = vmatprep.subr.bf16.mxu0 %v454
        %518 = vmatpush1.bf16.msra.mxu0 %v453
        %519 = vmatprep.subr.bf16.mxu0 %v456
        %520 = vmatpush1.bf16.msra.mxu0 %v455
        %521 = vmatprep.subr.bf16.mxu0 %v458
        %522 = vmatpush1.bf16.msra.mxu0 %v457
        %523 = vmatprep.subr.bf16.mxu0 %v460
        %524 = vmatpush1.bf16.msra.mxu0 %v459
        %525 = vmatprep.subr.bf16.mxu0 %v462
        %526 = vmatpush1.bf16.msra.mxu0 %v461
        %527 = vmatprep.subr.bf16.mxu0 %v464
        %528 = vmatpush1.bf16.msra.mxu0 %v463
        %529 = vmatprep.subr.bf16.mxu0 %v466
        %530 = vmatpush1.bf16.msra.mxu0 %v465
        %531 = vmatprep.subr.bf16.mxu0 %v468
        %532 = vmatpush1.bf16.msra.mxu0 %v467
        %533 = vmatprep.subr.bf16.mxu0 %v470
        %534 = vmatpush1.bf16.msra.mxu0 %v469
        %535 = vmatprep.subr.bf16.mxu0 %v472
        %536 = vmatpush1.bf16.msra.mxu0 %v471
        %537 = vmatprep.subr.bf16.mxu0 %v474
        %538 = vmatpush1.bf16.msra.mxu0 %v473
        %539 = vmatprep.subr.bf16.mxu0 %v476
        %540 = vmatpush1.bf16.msra.mxu0 %v475
        %541 = vmatprep.subr.bf16.mxu0 %v478
        %542 = vmatpush1.bf16.msra.mxu0 %v477
        %543 = vmatprep.subr.bf16.mxu0 %v480
        %544 = vmatpush1.bf16.msra.mxu0 %v479
        %545 = vmatprep.subr.bf16.mxu0 %v482
        %546 = vmatpush1.bf16.msra.mxu0 %v481
        %547 = vmatprep.mubr.bf16.mxu0 %v354
        %548 = vmatmul.mubr.bf16.gmra.mrb[0].mxu0 %v353
        %v549 = vpop.f32.mrb[0].mxu0
        %v550 = vadd.f32 0.0, %v549
        %v551 = vpop.f32.mrb[0].mxu0
        %v552 = vadd.f32 0.0, %v551
        %v553 = vpop.f32.mrb[0].mxu0
        %v554 = vadd.f32 0.0, %v553
        %v555 = vpop.f32.mrb[0].mxu0
        %v556 = vadd.f32 0.0, %v555
        %557 = vdwg.mxu0
        %558 = vmatprep.subr.bf16.mxu0 %v452
        %559 = vmatpush1.bf16.msra.mxu0 %v451
        %560 = vmatprep.subr.bf16.mxu0 %v454
        %561 = vmatpush1.bf16.msra.mxu0 %v453
        %562 = vmatprep.subr.bf16.mxu0 %v456
        %563 = vmatpush1.bf16.msra.mxu0 %v455
        %564 = vmatprep.subr.bf16.mxu0 %v458
        %565 = vmatpush1.bf16.msra.mxu0 %v457
        %566 = vmatprep.subr.bf16.mxu0 %v460
        %567 = vmatpush1.bf16.msra.mxu0 %v459
        %568 = vmatprep.subr.bf16.mxu0 %v462
        %569 = vmatpush1.bf16.msra.mxu0 %v461
        %570 = vmatprep.subr.bf16.mxu0 %v464
        %571 = vmatpush1.bf16.msra.mxu0 %v463
        %572 = vmatprep.subr.bf16.mxu0 %v466
        %573 = vmatpush1.bf16.msra.mxu0 %v465
        %574 = vmatprep.subr.bf16.mxu0 %v468
        %575 = vmatpush1.bf16.msra.mxu0 %v467
        %576 = vmatprep.subr.bf16.mxu0 %v470
        %577 = vmatpush1.bf16.msra.mxu0 %v469
        %578 = vmatprep.subr.bf16.mxu0 %v472
        %579 = vmatpush1.bf16.msra.mxu0 %v471
        %580 = vmatprep.subr.bf16.mxu0 %v474
        %581 = vmatpush1.bf16.msra.mxu0 %v473
        %582 = vmatprep.subr.bf16.mxu0 %v476
        %583 = vmatpush1.bf16.msra.mxu0 %v475
        %584 = vmatprep.subr.bf16.mxu0 %v478
        %585 = vmatpush1.bf16.msra.mxu0 %v477
        %586 = vmatprep.subr.bf16.mxu0 %v480
        %587 = vmatpush1.bf16.msra.mxu0 %v479
        %588 = vmatprep.subr.bf16.mxu0 %v482
        %589 = vmatpush1.bf16.msra.mxu0 %v481
        %590 = vmatprep.mubr.bf16.mxu0 %v344
        %591 = vmatmul.mubr.bf16.gmra.mrb[0].mxu0 %v343
        %v592 = vpop.f32.mrb[0].mxu0
        %v593 = vadd.f32 %v550, %v592
        %v594 = vpop.f32.mrb[0].mxu0
        %v595 = vadd.f32 %v552, %v594
        %v596 = vpop.f32.mrb[0].mxu0
        %v597 = vadd.f32 %v554, %v596
        %v598 = vpop.f32.mrb[0].mxu0
        %v599 = vadd.f32 %v556, %v598
        %600 = vdwg.mxu0
        %v602 = vlaneseq
        %v603 = vshrl.u32 %v602, 7
        %v604 = vsub.s32 1, %v603
        %v605 = vrot.slane %v309, %v604
        %v606 = vlaneseq
        %v607 = vshrl.u32 %v606, 7
        %v608 = vsub.s32 3, %v607
        %v609 = vrot.slane %v309, %v608
        %v612 = vlaneseq
        %v613 = vshrl.u32 %v612, 7
        %v614 = vsub.s32 1, %v613
        %v615 = vrot.slane %v605, %v614
        %v616 = vlaneseq
        %v617 = vshrl.u32 %v616, 7
        %v618 = vsub.s32 1, %v617
        %v619 = vrot.slane %v609, %v618
        %v620 = vmul.f32 %v593, %v615
        %v621 = vmul.f32 %v595, %v619
        %v622 = vmul.f32 %v597, %v615
        %v623 = vmul.f32 %v599, %v619
        %v624 = vlaneseq
        %v625 = vshrl.u32 %v624, 7
        %v626 = vsub.s32 0, %v625
        %v627 = vrot.slane %v309, %v626
        %v628 = vlaneseq
        %v629 = vshrl.u32 %v628, 7
        %v630 = vsub.s32 2, %v629
        %v631 = vrot.slane %v309, %v630
        %v634 = vlaneseq
        %v635 = vshrl.u32 %v634, 7
        %v636 = vsub.s32 0, %v635
        %v637 = vrot.slane %v627, %v636
        %v638 = vlaneseq
        %v639 = vshrl.u32 %v638, 7
        %v640 = vsub.s32 0, %v639
        %v641 = vrot.slane %v631, %v640
        %v642 = vmul.f32 %v305, %v637
        %v643 = vmul.f32 %v306, %v641
        %v644 = vmul.f32 %v307, %v637
        %v645 = vmul.f32 %v308, %v641
        %v646 = vadd.f32 %v642, %v620
        %v647 = vadd.f32 %v643, %v621
        %v648 = vadd.f32 %v644, %v622
        %v649 = vadd.f32 %v645, %v623
        %v650 = vstv %s310
        %v651 = vadd.f32 %v646, %v650
        %v652 = vadd.f32 %v647, %v650
        %v653 = vadd.f32 %v648, %v650
        %v654 = vadd.f32 %v649, %v650
        %655 = vst [vmem:[%s290] sm:$0xff] %v651
        %656 = vst [vmem:[%s290 + $0x8] sm:$0xff] %v652
        %657 = vst [vmem:[%s290 + $0x10] sm:$0xff] %v653
        %658 = vst [vmem:[%s290 + $0x18] sm:$0xff] %v654
        %s659 = sand.u32 %s137, 1
        %s660 = scalar_lea.sflag [#allocation4], %s659
        %s661 = sand.u32 %s137, 1
        %s662 = smul.addr %s661, 32
        %s663 = scalar_lea.vmem [#allocation10], %s662
        // Predicated region
        $region57: #{tpu_custom_call.1} parent=35 // pred_check
          %p664 = pneg %p147
        $region58: #{tpu_custom_call.1} parent=35 // pred_check_branch
          %666 = sbr.rel (%p664) target = $region60
        $region59: #{tpu_custom_call.1} parent=35 // pred_region
          %s667 = smul.u32 2, %s27
          %s669 = ssub.s32 512, 512
          %670 = vsyncadd %s660, %s669
          %s671 = smul.addr %s667, 2
          %s672 = smul.addr %s671, 128
          %s673 = scalar_lea.hbm %s4, %s672
          %s674 = sshll.u32 %s663, 4
          %s675 = int_to_ptr.vmem [resolvable:$true] %s674
          %680 = dma.vmem_to_hbm [thread:$0]  %s675, 512, %s673, %s660, 256, 256, 16
        $region60: #{tpu_custom_call.1} parent=35 // pred_fallthru
          _
      $region36: #{tpu_custom_call.1} parent=5 // pred_fallthru
        _
      %p681 = scmp.le.s32.totalorder 2, %s18
      // Predicated region
      $region61: #{tpu_custom_call.1} parent=5 // pred_check
        %p682 = pneg %p681
      $region62: #{tpu_custom_call.1} parent=5 // pred_check_branch
        %684 = sbr.rel (%p682) target = $region64
      $region63: #{tpu_custom_call.1} parent=5 // pred_region
        %s685 = ssub.s32 %s18, 2
        // Predicated region
        $region65: #{tpu_custom_call.1} parent=63 // pred_check
          %p686 = pneg %p153
        $region66: #{tpu_custom_call.1} parent=63 // pred_check_branch
          %688 = sbr.rel (%p686) target = $region68
        $region67: #{tpu_custom_call.1} parent=63 // pred_region
          %s689 = sand.u32 %s138, 1
          %s690 = scalar_lea.sflag [#allocation4], %s689
          %s691 = sand.u32 %s138, 1
          %s692 = smul.addr %s691, 32
          %s693 = scalar_lea.vmem [#allocation10], %s692
          %694 = dma.done %s690, 512
        $region68: #{tpu_custom_call.1} parent=63 // pred_fallthru
          _
      $region64: #{tpu_custom_call.1} parent=5 // pred_fallthru
        _
    $region6: #{tpu_custom_call.1} parent=1 // loop_footer
      %s22 = sadd.s32 1, %s18
    $region7: #{tpu_custom_call.1} parent=1 // loop_footer_branch
      %17 = sbr.rel target = $region3
    $region8: #{tpu_custom_call.1} parent=1 // loop_exit
      _
    %695 = vsyncpa [#allocation3], 1
    %s696 = scalar_lea.sflag [#allocation3], 1
    %697 = vsyncpa %s696, 1
    %698 = vsyncpa [#allocation8], 1
    %699 = vsyncpa [#allocation4], 1
    %s700 = scalar_lea.sflag [#allocation4], 1
    %701 = vsyncpa %s700, 1
    %702 = vsyncpa [#allocation5], 1
    %s703 = scalar_lea.sflag [#allocation5], 1
    %704 = vsyncpa %s703, 1

</llo_original>
